<compile_context>
chip_gen: v5e
topology: v5e:2x2
jax: 0.10.0
libtpu: 0.0.40
codegen_flags: <defaults>
</compile_context>

<pallas_src>
import jax
import jax.numpy as jnp
from jax.experimental import pallas as pl
from jax.experimental.pallas import tpu as pltpu

DIM = 2            # data dimension
LATENT = 128       # hidden width (DDPM latent_dim)
PE_DIM = 50        # sinusoidal-embedding latent_dim
PE_HALF = PE_DIM // 2
MAX_PERIOD = 10000
T_MAX = 1000


def _round_up(n, m):
    return ((n + m - 1) // m) * m


# ---------------------------------------------------------------------------
# Pallas kernel: PE + full DDPM MLP forward on one VMEM-resident batch tile.
#   tx_ref   : (tb, 4)   f32   col 0 = t, cols 1:3 = x, col 3 = pad
#   fp_ref   : (2, 50)   f32   row 0 = tiled freqs, row 1 = phase (0 | pi/2)
#   slab_ref : (8, 128)  f32   rows: be1, be2, b1, b2, b3, b4(pad), w1[0], w1[1]
#   we1/we2/w2/w3/w4     bf16  MXU weights (f32 accumulation in the dots)
# ---------------------------------------------------------------------------
def ddpm_kernel(tx_ref, fp_ref, slab_ref,
                we1_ref, we2_ref, w2_ref, w3_ref, w4_ref,
                o_ref):
    f32 = jnp.float32
    bf16 = jnp.bfloat16

    tx = tx_ref[...]                          # (tb, 4)
    t = tx[:, 0:1]                            # (tb, 1)
    x0 = tx[:, 1:2]
    x1 = tx[:, 2:3]

    # --- Fused sinusoidal PE: one sin pass over [sin | cos] lane layout -----
    freqs = fp_ref[0:1, :]                    # (1, 50)
    phase = fp_ref[1:2, :]                    # (1, 50)
    pe = jnp.sin(t * freqs + phase)           # (tb, 50), single EUP pass

    slab = slab_ref[...]                      # (8, 128)
    be1 = slab[0:1, :]
    be2 = slab[1:2, :]
    b1 = slab[2:3, :]
    b2 = slab[3:4, :]
    b3 = slab[4:5, :]
    b4 = slab[5:6, 0:DIM]
    w1r0 = slab[6:7, :]
    w1r1 = slab[7:8, :]

    # --- LearnableSinusoidalEmbedding: lin2(relu(lin1(pe))) -----------------
    h = jnp.dot(pe.astype(bf16), we1_ref[...], preferred_element_type=f32) + be1
    h = jnp.maximum(h, 0.0)                                             # (tb, 128)
    temb = jnp.dot(h.astype(bf16), we2_ref[...], preferred_element_type=f32) + be2

    # --- DDPM trunk ---------------------------------------------------------
    # lin1 has K=2: two VPU broadcast-FMAs instead of a degenerate MXU push.
    xw1 = x0 * w1r0 + x1 * w1r1                                         # (tb, 128)
    h = jnp.maximum(temb + xw1 + b1, 0.0)
    h = jnp.maximum(
        temb + jnp.dot(h.astype(bf16), w2_ref[...], preferred_element_type=f32) + b2,
        0.0)
    h = jnp.maximum(
        temb + jnp.dot(h.astype(bf16), w3_ref[...], preferred_element_type=f32) + b3,
        0.0)
    out = jnp.dot(h.astype(bf16), w4_ref[...], preferred_element_type=f32) + b4
    o_ref[...] = out.astype(o_ref.dtype)                                # (tb, 2)


# ---------------------------------------------------------------------------
# One-time repack for the kernel.  Keeps the PyTorch-layout f32 params intact
# (used by the references) and adds:
#   we1p/we2b/w2b/w3b/w4b : bf16 weights (we1 rows permuted to [sin|cos] layout)
#   freqs_phase           : (2, 50)  row0 freqs (tiled x2), row1 phase
#   slab                  : (8, 128) packed biases + padded b4 + w1 rows
# ---------------------------------------------------------------------------
def prepare_inference_params(params):
    kp = dict(params)

    perm = jnp.concatenate([jnp.arange(0, PE_DIM, 2), jnp.arange(1, PE_DIM, 2)])
    kp["we1p"] = params["we1"][perm, :].astype(jnp.bfloat16)            # (50, 128)
    kp["we2b"] = params["we2"].astype(jnp.bfloat16)                     # (128, 128)
    kp["w2b"] = params["w2"].astype(jnp.bfloat16)                       # (128, 128)
    kp["w3b"] = params["w3"].astype(jnp.bfloat16)                       # (128, 128)
    kp["w4b"] = params["w4"].astype(jnp.bfloat16)                       # (128, 2)

    freqs = 1.0 / jnp.power(
        jnp.float32(MAX_PERIOD),
        (2.0 / PE_DIM) * jnp.arange(PE_HALF, dtype=jnp.float32))        # (25,)
    freqs = jnp.tile(freqs, 2)[None, :]                                 # (1, 50)
    phase = jnp.concatenate(
        [jnp.zeros((1, PE_HALF), jnp.float32),
         jnp.full((1, PE_HALF), jnp.pi / 2, jnp.float32)], axis=1)      # (1, 50)
    kp["freqs_phase"] = jnp.concatenate([freqs, phase], axis=0)         # (2, 50)

    b4p = jnp.zeros((1, LATENT), jnp.float32).at[:, :DIM].set(params["b4"])
    kp["slab"] = jnp.concatenate(
        [params["be1"], params["be2"], params["b1"], params["b2"], params["b3"],
         b4p, params["w1"][0:1, :], params["w1"][1:2, :]], axis=0)      # (8, 128)
    return kp


def ddpm_forward(kparams, x, t, tile_b=2048):
    """x: (B, DIM) float32;  t: (B, 1) float32 timesteps."""
    B = x.shape[0]

    # Batch tiling.  tile_b=2048 amortizes the ~0.35us per-grid-step overhead and
    # keeps live VMEM well under the v7x 32 MiB default scoped limit.  For
    # 1024 <= B <= tile_b, split into >=2 grid steps so v7x's 2 TCs both get work.
    # (Don't grow tile_b past ~8K rows without also setting vmem_limit_bytes.)
    if B <= tile_b:
        if B >= 1024:
            tile_b = _round_up(-(-B // 2), 256)      # >=2 grid steps (megacore)
        else:
            tile_b = max(8, _round_up(B, 8))         # single sublane-aligned tile
    Bp = _round_up(B, tile_b)
    grid = (Bp // tile_b,)

    # Fuse t and x into one (Bp, 4) input: halves the tiny per-step input DMAs.
    tx = jnp.zeros((Bp, 4), jnp.float32)
    tx = tx.at[:B, 0:1].set(t).at[:B, 1:1 + DIM].set(x)

    weight_args = (
        kparams["freqs_phase"], kparams["slab"],
        kparams["we1p"], kparams["we2b"],
        kparams["w2b"], kparams["w3b"], kparams["w4b"],
    )

    in_specs = [
        pl.BlockSpec((tile_b, 4), lambda i: (i, 0)),        # fused t|x batch tile
    ] + [
        # Weights / biases / freqs: full block, constant index_map
        # -> stay VMEM-resident across all grid steps.
        pl.BlockSpec(a.shape, lambda i: (0, 0)) for a in weight_args
    ]
    out_spec = pl.BlockSpec((tile_b, DIM), lambda i: (i, 0))

    out = pl.pallas_call(
        ddpm_kernel,
        out_shape=jax.ShapeDtypeStruct((Bp, DIM), jnp.float32),
        grid_spec=pltpu.PrefetchScalarGridSpec(
            num_scalar_prefetch=0,
            grid=grid,
            in_specs=in_specs,
            out_specs=out_spec,
        ),
        compiler_params=pltpu.CompilerParams(
            dimension_semantics=("parallel",)),
    )(tx, *weight_args)
    return out[:B]


# ---------------------------------------------------------------------------
# References.
# ---------------------------------------------------------------------------
def sinusoidal_pe(t, dim, max_period):
    """PyTorch-exact interleaved PE (even cols sin, odd cols cos)."""
    assert dim % 2 == 0
    freqs = 1.0 / jnp.power(
        jnp.float32(max_period), 2.0 / dim * jnp.arange(dim // 2, dtype=jnp.float32))
    ang = freqs * t                                                     # (B, dim/2)
    emb = jnp.zeros((t.shape[0], dim), dtype=jnp.float32)
    emb = emb.at[:, 0::2].set(jnp.sin(ang))
    emb = emb.at[:, 1::2].set(jnp.cos(ang))
    return emb


def ddpm_reference(params, x, t):
    """Full-f32 reference with original PyTorch semantics."""
    pe = sinusoidal_pe(t, PE_DIM, MAX_PERIOD)
    h = jnp.maximum(pe @ params["we1"] + params["be1"], 0.0)
    temb = h @ params["we2"] + params["be2"]
    h = jnp.maximum(temb + x @ params["w1"] + params["b1"], 0.0)
    h = jnp.maximum(temb + h @ params["w2"] + params["b2"], 0.0)
    h = jnp.maximum(temb + h @ params["w3"] + params["b3"], 0.0)
    return h @ params["w4"] + params["b4"]


def ddpm_reference_mixed(kp, x, t):
    """Pure-JAX replica of the kernel's exact arithmetic (bf16 MXU, phase PE)."""
    f32, bf16 = jnp.float32, jnp.bfloat16
    freqs = kp["freqs_phase"][0:1, :]
    phase = kp["freqs_phase"][1:2, :]
    pe = jnp.sin(t * freqs + phase)
    h = jnp.maximum(
        jnp.dot(pe.astype(bf16), kp["we1p"], preferred_element_type=f32) + kp["be1"],
        0.0)
    temb = jnp.dot(h.astype(bf16), kp["we2b"], preferred_element_type=f32) + kp["be2"]
    xw1 = x[:, 0:1] * kp["w1"][0:1, :] + x[:, 1:2] * kp["w1"][1:2, :]
    h = jnp.maximum(temb + xw1 + kp["b1"], 0.0)
    h = jnp.maximum(
        temb + jnp.dot(h.astype(bf16), kp["w2b"], preferred_element_type=f32) + kp["b2"],
        0.0)
    h = jnp.maximum(
        temb + jnp.dot(h.astype(bf16), kp["w3b"], preferred_element_type=f32) + kp["b3"],
        0.0)
    return jnp.dot(h.astype(bf16), kp["w4b"], preferred_element_type=f32) + kp["b4"]


# ---------------------------------------------------------------------------
# Deterministic parameter init (PyTorch Linear stores (out, in); we store the
# transpose (in, out) so the kernel computes x @ W + b directly).
# ---------------------------------------------------------------------------
def init_params(key):
    ks = jax.random.split(key, 12)

    def lin(kw, kb, fan_in, fan_out):
        w = jax.random.normal(kw, (fan_in, fan_out), jnp.float32) * 0.05
        b = jax.random.normal(kb, (1, fan_out), jnp.float32) * 0.05
        return w, b

    p = {}
    p["we1"], p["be1"] = lin(ks[0], ks[1], PE_DIM, LATENT)   # emb.lin1: 50 -> 128
    p["we2"], p["be2"] = lin(ks[2], ks[3], LATENT, LATENT)   # emb.lin2: 128 -> 128
    p["w1"], p["b1"] = lin(ks[4], ks[5], DIM, LATENT)        # lin1: 2 -> 128
    p["w2"], p["b2"] = lin(ks[6], ks[7], LATENT, LATENT)     # lin2: 128 -> 128
    p["w3"], p["b3"] = lin(ks[8], ks[9], LATENT, LATENT)     # lin3: 128 -> 128
    p["w4"], p["b4"] = lin(ks[10], ks[11], LATENT, DIM)      # lin4: 128 -> 2
    return p


if __name__ == "__main__":
    key = jax.random.PRNGKey(0)
    k_param, k_x, k_t = jax.random.split(key, 3)

    B = 8
    params = init_params(k_param)
    kparams = prepare_inference_params(params)   # one-time weight repack

    x = jax.random.normal(k_x, (B, DIM), jnp.float32)                   # (8, 2) points
    t = jax.random.randint(k_t, (B, 1), 0, T_MAX).astype(jnp.float32)   # (8, 1) timesteps

    out = jax.block_until_ready(ddpm_forward(kparams, x, t))
    assert out.shape == (B, DIM)

    # 1) Kernel plumbing check: exact replica of the kernel arithmetic in JAX.
    ref_mixed = ddpm_reference_mixed(kparams, x, t)
    err_mixed = float(jnp.max(jnp.abs(out - ref_mixed)))
    assert jnp.allclose(out, ref_mixed, atol=1e-3, rtol=1e-3), (
        f"mixed-precision max abs err {err_mixed}")

    # 2) End-to-end semantics check vs the full-f32 PyTorch-equivalent reference
    #    (bf16 MXU operands + phase-trick PE -> slightly looser tolerance).
    ref_f32 = ddpm_reference(params, x, t)
    err_f32 = float(jnp.max(jnp.abs(out - ref_f32)))
    assert jnp.allclose(out, ref_f32, atol=5e-3, rtol=5e-3), (
        f"f32-reference max abs err {err_f32}")

    print("KERNEL_OK")
</pallas_src>

<mosaic_0001>
module attributes {stable_mosaic.version = 11 : i64} {
  func.func @ddpm_kernel(%arg0: i32, %arg1: memref<8x4xf32, #tpu.memory_space<vmem>>, %arg2: memref<2x50xf32, #tpu.memory_space<vmem>>, %arg3: memref<8x128xf32, #tpu.memory_space<vmem>>, %arg4: memref<50x128xbf16, #tpu.memory_space<vmem>>, %arg5: memref<128x128xbf16, #tpu.memory_space<vmem>>, %arg6: memref<128x128xbf16, #tpu.memory_space<vmem>>, %arg7: memref<128x128xbf16, #tpu.memory_space<vmem>>, %arg8: memref<128x2xbf16, #tpu.memory_space<vmem>>, %arg9: memref<8x2xf32, #tpu.memory_space<vmem>>) attributes {dimension_semantics = [#tpu.dimension_semantics<parallel>], iteration_bounds = array<i64: 1>, scalar_prefetch = 0 : i64, scratch_operands = 0 : i64, tpu.core_type = #tpu.core_type<tc>, window_params = [{transform_indices = @transform_0, window_bounds = array<i64: 8, 4>}, {pipeline_mode = #tpu.pipeline_mode<synchronous>, transform_indices = @transform_1, window_bounds = array<i64: 2, 50>}, {pipeline_mode = #tpu.pipeline_mode<synchronous>, transform_indices = @transform_2, window_bounds = array<i64: 8, 128>}, {pipeline_mode = #tpu.pipeline_mode<synchronous>, transform_indices = @transform_3, window_bounds = array<i64: 50, 128>}, {pipeline_mode = #tpu.pipeline_mode<synchronous>, transform_indices = @transform_4, window_bounds = array<i64: 128, 128>}, {pipeline_mode = #tpu.pipeline_mode<synchronous>, transform_indices = @transform_5, window_bounds = array<i64: 128, 128>}, {pipeline_mode = #tpu.pipeline_mode<synchronous>, transform_indices = @transform_6, window_bounds = array<i64: 128, 128>}, {pipeline_mode = #tpu.pipeline_mode<synchronous>, transform_indices = @transform_7, window_bounds = array<i64: 128, 2>}, {transform_indices = @transform_8, window_bounds = array<i64: 8, 2>}]} {
    %c0 = arith.constant 0 : index
    %c0_0 = arith.constant 0 : index
    %0 = vector.load %arg1[%c0, %c0_0] : memref<8x4xf32, #tpu.memory_space<vmem>>, vector<8x4xf32>
    %1 = vector.extract_strided_slice %0 {offsets = [0, 0], sizes = [8, 1], strides = [1, 1]} : vector<8x4xf32> to vector<8x1xf32>
    %2 = vector.extract_strided_slice %0 {offsets = [0, 1], sizes = [8, 1], strides = [1, 1]} : vector<8x4xf32> to vector<8x1xf32>
    %3 = vector.extract_strided_slice %0 {offsets = [0, 2], sizes = [8, 1], strides = [1, 1]} : vector<8x4xf32> to vector<8x1xf32>
    %c0_1 = arith.constant 0 : index
    %c0_2 = arith.constant 0 : index
    %4 = vector.load %arg2[%c0_1, %c0_2] : memref<2x50xf32, #tpu.memory_space<vmem>>, vector<1x50xf32>
    %c1 = arith.constant 1 : index
    %c0_3 = arith.constant 0 : index
    %5 = vector.load %arg2[%c1, %c0_3] : memref<2x50xf32, #tpu.memory_space<vmem>>, vector<1x50xf32>
    %6 = vector.broadcast %1 : vector<8x1xf32> to vector<8x50xf32>
    %7 = vector.broadcast %4 : vector<1x50xf32> to vector<8x50xf32>
    %8 = arith.mulf %6, %7 : vector<8x50xf32>
    %9 = vector.broadcast %5 : vector<1x50xf32> to vector<8x50xf32>
    %10 = arith.addf %8, %9 : vector<8x50xf32>
    %11 = math.sin %10 : vector<8x50xf32>
    %c0_4 = arith.constant 0 : index
    %c0_5 = arith.constant 0 : index
    %12 = vector.load %arg3[%c0_4, %c0_5] : memref<8x128xf32, #tpu.memory_space<vmem>>, vector<8x128xf32>
    %13 = vector.extract_strided_slice %12 {offsets = [0, 0], sizes = [1, 128], strides = [1, 1]} : vector<8x128xf32> to vector<1x128xf32>
    %14 = vector.extract_strided_slice %12 {offsets = [1, 0], sizes = [1, 128], strides = [1, 1]} : vector<8x128xf32> to vector<1x128xf32>
    %15 = vector.extract_strided_slice %12 {offsets = [2, 0], sizes = [1, 128], strides = [1, 1]} : vector<8x128xf32> to vector<1x128xf32>
    %16 = vector.extract_strided_slice %12 {offsets = [3, 0], sizes = [1, 128], strides = [1, 1]} : vector<8x128xf32> to vector<1x128xf32>
    %17 = vector.extract_strided_slice %12 {offsets = [4, 0], sizes = [1, 128], strides = [1, 1]} : vector<8x128xf32> to vector<1x128xf32>
    %18 = vector.extract_strided_slice %12 {offsets = [5, 0], sizes = [1, 2], strides = [1, 1]} : vector<8x128xf32> to vector<1x2xf32>
    %19 = vector.extract_strided_slice %12 {offsets = [6, 0], sizes = [1, 128], strides = [1, 1]} : vector<8x128xf32> to vector<1x128xf32>
    %20 = vector.extract_strided_slice %12 {offsets = [7, 0], sizes = [1, 128], strides = [1, 1]} : vector<8x128xf32> to vector<1x128xf32>
    %21 = arith.truncf %11 : vector<8x50xf32> to vector<8x50xbf16>
    %c0_6 = arith.constant 0 : index
    %c0_7 = arith.constant 0 : index
    %22 = vector.load %arg4[%c0_6, %c0_7] : memref<50x128xbf16, #tpu.memory_space<vmem>>, vector<50x128xbf16>
    %cst = arith.constant dense<0.000000e+00> : vector<8x128xf32>
    %23 = tpu.matmul %21, %22, %cst {dimension_numbers = #tpu.dot_dimension_numbers<[1], [0], [0], [1], [0, 0, 1, 1], [], []>} : vector<8x50xbf16>, vector<50x128xbf16>, vector<8x128xf32> -> vector<8x128xf32>
    %24 = vector.broadcast %13 : vector<1x128xf32> to vector<8x128xf32>
    %25 = arith.addf %23, %24 : vector<8x128xf32>
    %cst_8 = arith.constant 0.000000e+00 : f32
    %26 = vector.broadcast %cst_8 : f32 to vector<8x128xf32>
    %27 = arith.maximumf %25, %26 : vector<8x128xf32>
    %28 = arith.truncf %27 : vector<8x128xf32> to vector<8x128xbf16>
    %c0_9 = arith.constant 0 : index
    %c0_10 = arith.constant 0 : index
    %29 = vector.load %arg5[%c0_9, %c0_10] : memref<128x128xbf16, #tpu.memory_space<vmem>>, vector<128x128xbf16>
    %cst_11 = arith.constant dense<0.000000e+00> : vector<8x128xf32>
    %30 = tpu.matmul %28, %29, %cst_11 {dimension_numbers = #tpu.dot_dimension_numbers<[1], [0], [0], [1], [0, 0, 1, 1], [], []>} : vector<8x128xbf16>, vector<128x128xbf16>, vector<8x128xf32> -> vector<8x128xf32>
    %31 = vector.broadcast %14 : vector<1x128xf32> to vector<8x128xf32>
    %32 = arith.addf %30, %31 : vector<8x128xf32>
    %33 = vector.broadcast %2 : vector<8x1xf32> to vector<8x128xf32>
    %34 = vector.broadcast %19 : vector<1x128xf32> to vector<8x128xf32>
    %35 = arith.mulf %33, %34 : vector<8x128xf32>
    %36 = vector.broadcast %3 : vector<8x1xf32> to vector<8x128xf32>
    %37 = vector.broadcast %20 : vector<1x128xf32> to vector<8x128xf32>
    %38 = arith.mulf %36, %37 : vector<8x128xf32>
    %39 = arith.addf %35, %38 : vector<8x128xf32>
    %40 = arith.addf %32, %39 : vector<8x128xf32>
    %41 = vector.broadcast %15 : vector<1x128xf32> to vector<8x128xf32>
    %42 = arith.addf %40, %41 : vector<8x128xf32>
    %cst_12 = arith.constant 0.000000e+00 : f32
    %43 = vector.broadcast %cst_12 : f32 to vector<8x128xf32>
    %44 = arith.maximumf %42, %43 : vector<8x128xf32>
    %45 = arith.truncf %44 : vector<8x128xf32> to vector<8x128xbf16>
    %c0_13 = arith.constant 0 : index
    %c0_14 = arith.constant 0 : index
    %46 = vector.load %arg6[%c0_13, %c0_14] : memref<128x128xbf16, #tpu.memory_space<vmem>>, vector<128x128xbf16>
    %cst_15 = arith.constant dense<0.000000e+00> : vector<8x128xf32>
    %47 = tpu.matmul %45, %46, %cst_15 {dimension_numbers = #tpu.dot_dimension_numbers<[1], [0], [0], [1], [0, 0, 1, 1], [], []>} : vector<8x128xbf16>, vector<128x128xbf16>, vector<8x128xf32> -> vector<8x128xf32>
    %48 = arith.addf %32, %47 : vector<8x128xf32>
    %49 = vector.broadcast %16 : vector<1x128xf32> to vector<8x128xf32>
    %50 = arith.addf %48, %49 : vector<8x128xf32>
    %cst_16 = arith.constant 0.000000e+00 : f32
    %51 = vector.broadcast %cst_16 : f32 to vector<8x128xf32>
    %52 = arith.maximumf %50, %51 : vector<8x128xf32>
    %53 = arith.truncf %52 : vector<8x128xf32> to vector<8x128xbf16>
    %c0_17 = arith.constant 0 : index
    %c0_18 = arith.constant 0 : index
    %54 = vector.load %arg7[%c0_17, %c0_18] : memref<128x128xbf16, #tpu.memory_space<vmem>>, vector<128x128xbf16>
    %cst_19 = arith.constant dense<0.000000e+00> : vector<8x128xf32>
    %55 = tpu.matmul %53, %54, %cst_19 {dimension_numbers = #tpu.dot_dimension_numbers<[1], [0], [0], [1], [0, 0, 1, 1], [], []>} : vector<8x128xbf16>, vector<128x128xbf16>, vector<8x128xf32> -> vector<8x128xf32>
    %56 = arith.addf %32, %55 : vector<8x128xf32>
    %57 = vector.broadcast %17 : vector<1x128xf32> to vector<8x128xf32>
    %58 = arith.addf %56, %57 : vector<8x128xf32>
    %cst_20 = arith.constant 0.000000e+00 : f32
    %59 = vector.broadcast %cst_20 : f32 to vector<8x128xf32>
    %60 = arith.maximumf %58, %59 : vector<8x128xf32>
    %61 = arith.truncf %60 : vector<8x128xf32> to vector<8x128xbf16>
    %c0_21 = arith.constant 0 : index
    %c0_22 = arith.constant 0 : index
    %62 = vector.load %arg8[%c0_21, %c0_22] : memref<128x2xbf16, #tpu.memory_space<vmem>>, vector<128x2xbf16>
    %cst_23 = arith.constant dense<0.000000e+00> : vector<8x2xf32>
    %63 = tpu.matmul %61, %62, %cst_23 {dimension_numbers = #tpu.dot_dimension_numbers<[1], [0], [0], [1], [0, 0, 1, 1], [], []>} : vector<8x128xbf16>, vector<128x2xbf16>, vector<8x2xf32> -> vector<8x2xf32>
    %64 = vector.broadcast %18 : vector<1x2xf32> to vector<8x2xf32>
    %65 = arith.addf %63, %64 : vector<8x2xf32>
    %c0_24 = arith.constant 0 : index
    %c0_25 = arith.constant 0 : index
    %66 = vector.load %arg9[%c0_24, %c0_25] : memref<8x2xf32, #tpu.memory_space<vmem>>, vector<8x2xf32>
    tpu.vector_store %arg9[%c0_24, %c0_25], %65 {strides = array<i32>} : memref<8x2xf32, #tpu.memory_space<vmem>>, vector<8x2xf32>,
    return
  }
  func.func @transform_0(%arg0: i32) -> (i32, i32) {
    %c0_i32 = arith.constant 0 : i32
    %c0_i32_0 = arith.constant 0 : i32
    return %arg0, %c0_i32 : i32, i32
  }
  func.func @transform_1(%arg0: i32) -> (i32, i32) {
    %c0_i32 = arith.constant 0 : i32
    %c0_i32_0 = arith.constant 0 : i32
    %c0_i32_1 = arith.constant 0 : i32
    return %c0_i32, %c0_i32_0 : i32, i32
  }
  func.func @transform_2(%arg0: i32) -> (i32, i32) {
    %c0_i32 = arith.constant 0 : i32
    %c0_i32_0 = arith.constant 0 : i32
    %c0_i32_1 = arith.constant 0 : i32
    return %c0_i32, %c0_i32_0 : i32, i32
  }
  func.func @transform_3(%arg0: i32) -> (i32, i32) {
    %c0_i32 = arith.constant 0 : i32
    %c0_i32_0 = arith.constant 0 : i32
    %c0_i32_1 = arith.constant 0 : i32
    return %c0_i32, %c0_i32_0 : i32, i32
  }
  func.func @transform_4(%arg0: i32) -> (i32, i32) {
    %c0_i32 = arith.constant 0 : i32
    %c0_i32_0 = arith.constant 0 : i32
    %c0_i32_1 = arith.constant 0 : i32
    return %c0_i32, %c0_i32_0 : i32, i32
  }
  func.func @transform_5(%arg0: i32) -> (i32, i32) {
    %c0_i32 = arith.constant 0 : i32
    %c0_i32_0 = arith.constant 0 : i32
    %c0_i32_1 = arith.constant 0 : i32
    return %c0_i32, %c0_i32_0 : i32, i32
  }
  func.func @transform_6(%arg0: i32) -> (i32, i32) {
    %c0_i32 = arith.constant 0 : i32
    %c0_i32_0 = arith.constant 0 : i32
    %c0_i32_1 = arith.constant 0 : i32
    return %c0_i32, %c0_i32_0 : i32, i32
  }
  func.func @transform_7(%arg0: i32) -> (i32, i32) {
    %c0_i32 = arith.constant 0 : i32
    %c0_i32_0 = arith.constant 0 : i32
    %c0_i32_1 = arith.constant 0 : i32
    return %c0_i32, %c0_i32_0 : i32, i32
  }
  func.func @transform_8(%arg0: i32) -> (i32, i32) {
    %c0_i32 = arith.constant 0 : i32
    %c0_i32_0 = arith.constant 0 : i32
    return %arg0, %c0_i32 : i32, i32
  }
}

</mosaic_0001>

<llo_original>
// kernel: tpu_custom_call.1
$region0: #{tpu_custom_call.1}
  #allocation0 [shape = 'u32[]', space=smem, size = 0x4, offset = 0x4, fixed_abs, tag = 'smem constant byte address 0x4 - core index']
  #allocation1 [shape = 'u32[72,128]{1,0:T(1,128)}', space=vmem, size = 0x9000, scoped, tag = 'internal scratch']
  %s0 = inlined_call_operand.vmem [shape: f32[8,4], index: 0, kind: input, shape index: {}]
  %s1 = inlined_call_operand.vmem [shape: f32[2,50], index: 1, kind: input, shape index: {}]
  %s2 = inlined_call_operand.vmem [shape: f32[8,128], index: 2, kind: input, shape index: {}]
  %s3 = inlined_call_operand.hbm [shape: bf16[50,128], index: 3, kind: input, shape index: {}]
  %s4 = inlined_call_operand.vmem [shape: bf16[128,128], index: 4, kind: input, shape index: {}]
  %s5 = inlined_call_operand.hbm [shape: bf16[128,128], index: 5, kind: input, shape index: {}]
  %s6 = inlined_call_operand.hbm [shape: bf16[128,128], index: 6, kind: input, shape index: {}]
  %s7 = inlined_call_operand.vmem [shape: bf16[128,2], index: 7, kind: input, shape index: {}]
  %s8 = inlined_call_operand.vmem [shape: f32[8,2], index: 8, kind: output, shape index: {}]
  %s9 = sld [smem:[#allocation0]]
  $region54: #{tpu_custom_call.1} parent=0
    _
  %s11 = ssub.s32 1, %s9
  %s12 = scalar_select 0, %s11, %s9
  $region1: #{tpu_custom_call.1} parent=0
    #allocation2 [shape = 'u8[14336]{0}', space=vmem, size = 0x3800, scoped, tag = 'input window, operand 3, single buffered']
    #allocation3 [shape = 's32[1]{0}', space=sflag, size = 0x4, scoped, tag = 'scoped memory for tpu_custom_call.1']
    #allocation4 [shape = 'u8[32768]{0}', space=vmem, size = 0x8000, scoped, tag = 'input window, operand 5, single buffered']
    #allocation5 [shape = 's32[1]{0}', space=sflag, size = 0x4, scoped, tag = 'scoped memory for tpu_custom_call.1']
    #allocation6 [shape = 'u8[32768]{0}', space=vmem, size = 0x8000, scoped, tag = 'input window, operand 6, single buffered']
    %13 = vsyncpa [#allocation3], 0
    %14 = vsyncpa [#allocation5], 0
    // Predicated region
    $region2: #{tpu_custom_call.1} parent=1 // pred_check
      _
    $region3: #{tpu_custom_call.1} parent=1 // pred_check_branch
      %16 = sbr.rel (0) target = $region5
    $region4: #{tpu_custom_call.1} parent=1 // pred_region
      _
    $region5: #{tpu_custom_call.1} parent=1 // pred_fallthru
      _
    // Predicated region
    $region6: #{tpu_custom_call.1} parent=1 // pred_check
      _
    $region7: #{tpu_custom_call.1} parent=1 // pred_check_branch
      %18 = sbr.rel (0) target = $region9
    $region8: #{tpu_custom_call.1} parent=1 // pred_region
      _
    $region9: #{tpu_custom_call.1} parent=1 // pred_fallthru
      _
    // Predicated region
    $region10: #{tpu_custom_call.1} parent=1 // pred_check
      _
    $region11: #{tpu_custom_call.1} parent=1 // pred_check_branch
      %20 = sbr.rel (0) target = $region13
    $region12: #{tpu_custom_call.1} parent=1 // pred_region
      _
    $region13: #{tpu_custom_call.1} parent=1 // pred_fallthru
      _
    // Predicated region
    $region14: #{tpu_custom_call.1} parent=1 // pred_check
      _
    $region15: #{tpu_custom_call.1} parent=1 // pred_check_branch
      %22 = sbr.rel (0) target = $region17
    $region16: #{tpu_custom_call.1} parent=1 // pred_region
      %24 = vsyncadd [#allocation3], 0
      %s25 = sshll.u32 %s3, 4
      %s26 = int_to_ptr.hbm [resolvable:$true] %s25
      %s27 = sshll.u32 [#allocation2], 4
      %s28 = int_to_ptr.vmem [resolvable:$true] %s27
      %33 = dma.hbm_to_vmem [thread:$0]  %s26, 448, %s28, [#allocation3], 64, 64, 4
    $region17: #{tpu_custom_call.1} parent=1 // pred_fallthru
      _
    // Predicated region
    $region18: #{tpu_custom_call.1} parent=1 // pred_check
      _
    $region19: #{tpu_custom_call.1} parent=1 // pred_check_branch
      %35 = sbr.rel (0) target = $region21
    $region20: #{tpu_custom_call.1} parent=1 // pred_region
      _
    $region21: #{tpu_custom_call.1} parent=1 // pred_fallthru
      _
    // Predicated region
    $region22: #{tpu_custom_call.1} parent=1 // pred_check
      _
    $region23: #{tpu_custom_call.1} parent=1 // pred_check_branch
      %37 = sbr.rel (0) target = $region25
    $region24: #{tpu_custom_call.1} parent=1 // pred_region
      %39 = vsyncadd [#allocation5], 0
      %s40 = sshll.u32 %s5, 4
      %s41 = int_to_ptr.hbm [resolvable:$true] %s40
      %s42 = sshll.u32 [#allocation4], 4
      %s43 = int_to_ptr.vmem [resolvable:$true] %s42
      %48 = dma.hbm_to_vmem [thread:$0]  %s41, 1024, %s43, [#allocation5], 64, 64, 4
    $region25: #{tpu_custom_call.1} parent=1 // pred_fallthru
      _
    // Predicated region
    $region26: #{tpu_custom_call.1} parent=1 // pred_check
      _
    $region27: #{tpu_custom_call.1} parent=1 // pred_check_branch
      %50 = sbr.rel (0) target = $region29
    $region28: #{tpu_custom_call.1} parent=1 // pred_region
      %52 = vsyncadd [#allocation5], 0
      %s53 = sshll.u32 %s6, 4
      %s54 = int_to_ptr.hbm [resolvable:$true] %s53
      %s55 = sshll.u32 [#allocation6], 4
      %s56 = int_to_ptr.vmem [resolvable:$true] %s55
      %61 = dma.hbm_to_vmem [thread:$0]  %s54, 1024, %s56, [#allocation5], 64, 64, 4
    $region29: #{tpu_custom_call.1} parent=1 // pred_fallthru
      _
    // Predicated region
    $region30: #{tpu_custom_call.1} parent=1 // pred_check
      _
    $region31: #{tpu_custom_call.1} parent=1 // pred_check_branch
      %63 = sbr.rel (0) target = $region33
    $region32: #{tpu_custom_call.1} parent=1 // pred_region
      _
    $region33: #{tpu_custom_call.1} parent=1 // pred_fallthru
      _
    // Predicated region
    $region34: #{tpu_custom_call.1} parent=1 // pred_check
      _
    $region35: #{tpu_custom_call.1} parent=1 // pred_check_branch
      %65 = sbr.rel (0) target = $region37
    $region36: #{tpu_custom_call.1} parent=1 // pred_region
      %67 = dma.done [#allocation3], 448
    $region37: #{tpu_custom_call.1} parent=1 // pred_fallthru
      _
    // Predicated region
    $region38: #{tpu_custom_call.1} parent=1 // pred_check
      _
    $region39: #{tpu_custom_call.1} parent=1 // pred_check_branch
      %69 = sbr.rel (0) target = $region41
    $region40: #{tpu_custom_call.1} parent=1 // pred_region
      %71 = dma.done [#allocation5], 1024
    $region41: #{tpu_custom_call.1} parent=1 // pred_fallthru
      _
    // Predicated region
    $region42: #{tpu_custom_call.1} parent=1 // pred_check
      _
    $region43: #{tpu_custom_call.1} parent=1 // pred_check_branch
      %73 = sbr.rel (0) target = $region45
    $region44: #{tpu_custom_call.1} parent=1 // pred_region
      %75 = dma.done [#allocation5], 1024
    $region45: #{tpu_custom_call.1} parent=1 // pred_fallthru
      _
    %v77 = vld [vmem:[%s0] sm:$0xff]
    %v78 = vld [vmem:[%s1] sm:$0x1]
    %v79 = vld [vmem:[%s1 + $0x1] sm:$0x1]
    %81 = vset.pattern.permute.xlu0 0
    %82 = vperm.xlu0 %81, %v77
    %v83 = vpop.permute.xlu0 %82
    %v85 = vperm.slane %v78, 0
    %v86 = vmul.f32 %v83, %v85
    %v87 = vperm.slane %v79, 0
    %v88 = vadd.f32 %v86, %v87
    %v89 = vand.u32 2147483647, %v88
    %vm90 = vcmp.le.f32.partialorder %v89, 0.7853982
    %vm91 = vcmp.lt.s32.totalorder %v88, 0
    %v92 = vand.u32 %v88, 2139095040
    %v93 = vshrl.u32 %v92, 23
    %v94 = vsub.s32 %v93, 127
    %v95 = vand.u32 2147483647, %v88
    %v96 = vand.u32 %v95, 8388607
    %v97 = vor.u32 %v96, 8388608
    %v98 = vsub.s32 0, %v97
    %v99 = vadd.s32 %v94, 1
    %vm100 = vcmp.gt.s32.totalorder %v99, 0
    %v101 = vsel %vm100, %v99, 0
    %v102 = vshrl.u32 %v101, 5
    %v103 = vand.u32 %v101, 31
    %v104 = vsub.s32 32, %v103
    %v105 = vshrl.u32 683565275, %v104
    %v106 = vshll.u32 683565275, %v103
    %v107 = vshrl.u32 2475754826, %v104
    %v108 = vor.u32 %v106, %v107
    %v109 = vshll.u32 2475754826, %v103
    %v110 = vshrl.u32 2131351028, %v104
    %v111 = vor.u32 %v109, %v110
    %v112 = vshll.u32 2131351028, %v103
    %v113 = vshrl.u32 2102212464, %v104
    %v114 = vor.u32 %v112, %v113
    %v115 = vshll.u32 2102212464, %v103
    %v116 = vshrl.u32 920167782, %v104
    %v117 = vor.u32 %v115, %v116
    %v118 = vshll.u32 920167782, %v103
    %v119 = vshrl.u32 1326507024, %v104
    %v120 = vor.u32 %v118, %v119
    %vm121 = vcmp.lt.s32.totalorder %v102, 1
    %vm122 = vcmp.lt.s32.totalorder %v102, 2
    %vm123 = vcmp.lt.s32.totalorder %v102, 3
    %vm124 = vcmp.lt.s32.totalorder %v102, 4
    %v125 = vsel %vm121, %v105, %v108
    %v126 = vsel %vm124, %v114, 2102212464
    %v127 = vsel %vm123, %v111, %v126
    %v128 = vsel %vm122, %v125, %v127
    %v129 = vsel %vm121, %v108, %v111
    %v130 = vsel %vm124, %v117, 920167782
    %v131 = vsel %vm123, %v114, %v130
    %v132 = vsel %vm122, %v129, %v131
    %v133 = vsel %vm121, %v111, %v114
    %v134 = vsel %vm124, %v120, 1326507024
    %v135 = vsel %vm123, %v117, %v134
    %v136 = vsel %vm122, %v133, %v135
    %v137 = vshll.u32 %v97, 8
    %v138 = vand.u32 %v137, 65535
    %v139 = vshrl.u32 %v137, 16
    %v140 = vand.u32 %v136, 65535
    %v141 = vshrl.u32 %v136, 16
    %v142 = vmul.u32 %v138, %v140
    %v143 = vmul.u32 %v138, %v141
    %v144 = vmul.u32 %v139, %v140
    %v145 = vmul.u32 %v139, %v141
    %v146 = vshll.u32 %v143, 16
    %v147 = vshrl.u32 %v143, 16
    %v148 = vshll.u32 %v144, 16
    %v149 = vshrl.u32 %v144, 16
    %vm150 = vc.u32 %v142, %v146
    %v151 = vsel %vm150, 1, 0
    %v152 = vadd.s32 %v142, %v146
    %v153 = vadd.s32 %v145, %v151
    %vm154 = vc.u32 %v152, %v148
    %v155 = vsel %vm154, 1, 0
    %v156 = vadd.s32 %v152, %v148
    %v157 = vadd.s32 %v153, %v155
    %v158 = vadd.s32 %v157, %v147
    %v159 = vadd.s32 %v158, %v149
    %v160 = vand.u32 %v137, 65535
    %v161 = vshrl.u32 %v137, 16
    %v162 = vand.u32 %v132, 65535
    %v163 = vshrl.u32 %v132, 16
    %v164 = vmul.u32 %v160, %v162
    %v165 = vmul.u32 %v160, %v163
    %v166 = vmul.u32 %v161, %v162
    %v167 = vmul.u32 %v161, %v163
    %v168 = vshll.u32 %v165, 16
    %v169 = vshrl.u32 %v165, 16
    %v170 = vshll.u32 %v166, 16
    %v171 = vshrl.u32 %v166, 16
    %vm172 = vc.u32 %v164, %v168
    %v173 = vsel %vm172, 1, 0
    %v174 = vadd.s32 %v164, %v168
    %v175 = vadd.s32 %v167, %v173
    %vm176 = vc.u32 %v174, %v170
    %v177 = vsel %vm176, 1, 0
    %v178 = vadd.s32 %v174, %v170
    %v179 = vadd.s32 %v175, %v177
    %v180 = vadd.s32 %v179, %v169
    %v181 = vadd.s32 %v180, %v171
    %v182 = vmul.u32 %v137, %v128
    %v183 = vadd.s32 %v159, %v178
    %vm184 = vc.u32 %v159, %v178
    %v185 = vadd.s32 %v181, 1
    %v186 = vsel %vm184, %v185, %v181
    %v187 = vadd.s32 %v182, %v186
    %v188 = vadd.s32 %v187, 536870912
    %v189 = vshrl.u32 %v188, 30
    %v190 = vshll.u32 %v189, 30
    %v191 = vsub.s32 %v187, %v190
    %vm192 = vcmp.lt.s32.totalorder %v191, 0
    %v193 = vsub.s32 0, %v191
    %v194 = vsel %vm192, %v193, %v191
    %v195 = vclz %v194
    %v196 = vsub.s32 %v195, 2
    %vm197 = vcmp.gt.s32.totalorder 0, %v196
    %v198 = vsel %vm197, 0, %v196
    %v199 = vsub.s32 32, %v198
    %v200 = vshll.u32 %v191, %v198
    %v201 = vshrl.u32 %v183, %v199
    %v202 = vor.u32 %v200, %v201
    %v203 = vsub.s32 4294967266, %v198
    %v204 = vadd.s32 %v203, 127
    %v205 = vshll.u32 %v204, 23
    %v206 = vor.u32 4788187, %v205
    %v207 = vand.u32 2147483647, %v206
    %v209 = vcvt.s32.f32 %v202
    %v210 = vmul.f32 %v209, %v207
    %v211 = vxor.u32 %v210, 2147483648
    %v212 = vsel %vm91, %v211, %v210
    %v213 = vsub.s32 4, %v189
    %v214 = vsel %vm91, %v213, %v189
    %v215 = vsel %vm90, %v88, %v212
    %v216 = vsel %vm90, 0, %v214
    %v217 = vmul.f32 %v215, %v215
    %v218 = vmul.f32 %v217, -0.001358992
    %v219 = vadd.f32 %v218, 0.041655596
    %v220 = vmul.f32 %v217, %v219
    %v221 = vadd.f32 %v220, -0.4999988
    %v222 = vmul.f32 %v217, %v221
    %v223 = vadd.f32 1.0, %v222
    %v224 = vmul.f32 %v215, %v215
    %v225 = vmul.f32 %v224, -0.00019511016
    %v226 = vadd.f32 %v225, 0.008332121
    %v227 = vmul.f32 %v224, %v226
    %v228 = vadd.f32 %v227, -0.16666654
    %v229 = vmul.f32 %v224, %v228
    %v230 = vadd.f32 %v229, 1.0
    %v231 = vmul.f32 %v230, %v215
    %vm232 = vweird.f32 %v88
    %v233 = vadd.s32 %v216, 3
    %v234 = vand.u32 %v233, 3
    %vm235 = vcmp.lt.s32.totalorder %v234, 2
    %vm236 = vcmp.eq.s32.totalorder %v234, 0
    %v237 = vxor.u32 %v231, 2147483648
    %v238 = vsel %vm236, %v223, %v237
    %vm239 = vcmp.eq.s32.totalorder %v234, 2
    %v240 = vxor.u32 %v223, 2147483648
    %v241 = vsel %vm239, %v240, %v231
    %v242 = vsel %vm235, %v238, %v241
    %v243 = vsel %vm232, nan, %v242
    %v244 = vld [vmem:[%s2] sm:$0xff]
    %v245 = vpack.c.bf16 %v243, %v243
    %v246 = vld [vmem:[#allocation2] sm:$0xf]
    %v247 = vld [vmem:[#allocation2 + $0x4] sm:$0xf]
    %v248 = vld [vmem:[#allocation2 + $0x8] sm:$0xf]
    %v249 = vld [vmem:[#allocation2 + $0xc] sm:$0xf]
    %v250 = vld [vmem:[#allocation2 + $0x10] sm:$0xf]
    %v251 = vld [vmem:[#allocation2 + $0x14] sm:$0xf]
    %v252 = vld [vmem:[#allocation2 + $0x18] sm:$0x1]
    %v253 = vperm.slane %v244, 0
    %v261 = vunpack.c.l.b16 %v246
    %v262 = vunpack.c.l.b16 %v247
    %v263 = vunpack.c.l.b16 %v248
    %v264 = vunpack.c.l.b16 %v249
    %v265 = vunpack.c.l.b16 %v250
    %v266 = vunpack.c.l.b16 %v251
    %v267 = vunpack.c.l.b16 %v252
    %v268 = vpack.c.b16 %v262, %v261
    %v269 = vpack.c.b16 %v264, %v263
    %v270 = vpack.c.b16 %v266, %v265
    %v271 = vpack.c.b16 %v267, %v267
    %vm275 = vcmask 408576
    %v277 = vsel %vm275, %v245, 0
    %vm279 = vcmask 1040384
    %v281 = vsel %vm279, %v271, 0
    %283 = vmatpush.bf16.msra.mxu0 0
    %284 = vmatpush.bf16.msra.mxu0 0
    %285 = vmatpush.bf16.msra.mxu0 0
    %286 = vmatpush.bf16.msra.mxu0 0
    %287 = vmatpush.bf16.msra.mxu0 %v281
    %288 = vmatpush.bf16.msra.mxu0 %v270
    %289 = vmatpush.bf16.msra.mxu0 %v269
    %290 = vmatpush.bf16.msra.mxu0 %v268
    %291 = vmatmul.bf16.gmra.mxu0 %v277
    %v292 = vpop.f32.mrf.mxu0
    %v293 = vadd.f32 %v253, %v292
    %v294 = vpop.f32.mrf.mxu0
    %295 = vdwg.mxu0
    %v296 = vmax.f32 %v293, 0.0
    %v297 = vpack.c.bf16 %v296, %v296
    %v298 = vld [vmem:[%s4] sm:$0xf]
    %v299 = vld [vmem:[%s4 + $0x4] sm:$0xf]
    %v300 = vld [vmem:[%s4 + $0x8] sm:$0xf]
    %v301 = vld [vmem:[%s4 + $0xc] sm:$0xf]
    %v302 = vld [vmem:[%s4 + $0x10] sm:$0xf]
    %v303 = vld [vmem:[%s4 + $0x14] sm:$0xf]
    %v304 = vld [vmem:[%s4 + $0x18] sm:$0xf]
    %v305 = vld [vmem:[%s4 + $0x1c] sm:$0xf]
    %v306 = vld [vmem:[%s4 + $0x20] sm:$0xf]
    %v307 = vld [vmem:[%s4 + $0x24] sm:$0xf]
    %v308 = vld [vmem:[%s4 + $0x28] sm:$0xf]
    %v309 = vld [vmem:[%s4 + $0x2c] sm:$0xf]
    %v310 = vld [vmem:[%s4 + $0x30] sm:$0xf]
    %v311 = vld [vmem:[%s4 + $0x34] sm:$0xf]
    %v312 = vld [vmem:[%s4 + $0x38] sm:$0xf]
    %v313 = vld [vmem:[%s4 + $0x3c] sm:$0xf]
    %v314 = vperm.slane %v244, 1
    %v331 = vunpack.c.l.b16 %v298
    %v332 = vunpack.c.l.b16 %v299
    %v333 = vunpack.c.l.b16 %v300
    %v334 = vunpack.c.l.b16 %v301
    %v335 = vunpack.c.l.b16 %v302
    %v336 = vunpack.c.l.b16 %v303
    %v337 = vunpack.c.l.b16 %v304
    %v338 = vunpack.c.l.b16 %v305
    %v339 = vunpack.c.l.b16 %v306
    %v340 = vunpack.c.l.b16 %v307
    %v341 = vunpack.c.l.b16 %v308
    %v342 = vunpack.c.l.b16 %v309
    %v343 = vunpack.c.l.b16 %v310
    %v344 = vunpack.c.l.b16 %v311
    %v345 = vunpack.c.l.b16 %v312
    %v346 = vunpack.c.l.b16 %v313
    %v347 = vpack.c.b16 %v332, %v331
    %v348 = vpack.c.b16 %v334, %v333
    %v349 = vpack.c.b16 %v336, %v335
    %v350 = vpack.c.b16 %v338, %v337
    %v351 = vpack.c.b16 %v340, %v339
    %v352 = vpack.c.b16 %v342, %v341
    %v353 = vpack.c.b16 %v344, %v343
    %v354 = vpack.c.b16 %v346, %v345
    %363 = vmatpush.bf16.msra.mxu0 %v354
    %364 = vmatpush.bf16.msra.mxu0 %v353
    %365 = vmatpush.bf16.msra.mxu0 %v352
    %366 = vmatpush.bf16.msra.mxu0 %v351
    %367 = vmatpush.bf16.msra.mxu0 %v350
    %368 = vmatpush.bf16.msra.mxu0 %v349
    %369 = vmatpush.bf16.msra.mxu0 %v348
    %370 = vmatpush.bf16.msra.mxu0 %v347
    %371 = vmatmul.bf16.gmra.mxu0 %v297
    %v372 = vpop.f32.mrf.mxu0
    %v373 = vadd.f32 %v314, %v372
    %v374 = vpop.f32.mrf.mxu0
    %375 = vdwg.mxu0
    %376 = vset.pattern.permute.xlu0 1
    %377 = vperm.xlu0 %376, %v77
    %v378 = vpop.permute.xlu0 %377
    %v380 = vperm.slane %v244, 6
    %v381 = vmul.f32 %v378, %v380
    %382 = vset.pattern.permute.xlu0 2
    %383 = vperm.xlu0 %382, %v77
    %v384 = vpop.permute.xlu0 %383
    %v386 = vperm.slane %v244, 7
    %v387 = vmul.f32 %v384, %v386
    %v388 = vadd.f32 %v381, %v387
    %v389 = vadd.f32 %v373, %v388
    %v390 = vperm.slane %v244, 2
    %v391 = vadd.f32 %v389, %v390
    %v392 = vmax.f32 %v391, 0.0
    %v393 = vpack.c.bf16 %v392, %v392
    %v394 = vld [vmem:[#allocation4] sm:$0xf]
    %v395 = vld [vmem:[#allocation4 + $0x4] sm:$0xf]
    %v396 = vld [vmem:[#allocation4 + $0x8] sm:$0xf]
    %v397 = vld [vmem:[#allocation4 + $0xc] sm:$0xf]
    %v398 = vld [vmem:[#allocation4 + $0x10] sm:$0xf]
    %v399 = vld [vmem:[#allocation4 + $0x14] sm:$0xf]
    %v400 = vld [vmem:[#allocation4 + $0x18] sm:$0xf]
    %v401 = vld [vmem:[#allocation4 + $0x1c] sm:$0xf]
    %v402 = vld [vmem:[#allocation4 + $0x20] sm:$0xf]
    %v403 = vld [vmem:[#allocation4 + $0x24] sm:$0xf]
    %v404 = vld [vmem:[#allocation4 + $0x28] sm:$0xf]
    %v405 = vld [vmem:[#allocation4 + $0x2c] sm:$0xf]
    %v406 = vld [vmem:[#allocation4 + $0x30] sm:$0xf]
    %v407 = vld [vmem:[#allocation4 + $0x34] sm:$0xf]
    %v408 = vld [vmem:[#allocation4 + $0x38] sm:$0xf]
    %v409 = vld [vmem:[#allocation4 + $0x3c] sm:$0xf]
    %v426 = vunpack.c.l.b16 %v394
    %v427 = vunpack.c.l.b16 %v395
    %v428 = vunpack.c.l.b16 %v396
    %v429 = vunpack.c.l.b16 %v397
    %v430 = vunpack.c.l.b16 %v398
    %v431 = vunpack.c.l.b16 %v399
    %v432 = vunpack.c.l.b16 %v400
    %v433 = vunpack.c.l.b16 %v401
    %v434 = vunpack.c.l.b16 %v402
    %v435 = vunpack.c.l.b16 %v403
    %v436 = vunpack.c.l.b16 %v404
    %v437 = vunpack.c.l.b16 %v405
    %v438 = vunpack.c.l.b16 %v406
    %v439 = vunpack.c.l.b16 %v407
    %v440 = vunpack.c.l.b16 %v408
    %v441 = vunpack.c.l.b16 %v409
    %v442 = vpack.c.b16 %v427, %v426
    %v443 = vpack.c.b16 %v429, %v428
    %v444 = vpack.c.b16 %v431, %v430
    %v445 = vpack.c.b16 %v433, %v432
    %v446 = vpack.c.b16 %v435, %v434
    %v447 = vpack.c.b16 %v437, %v436
    %v448 = vpack.c.b16 %v439, %v438
    %v449 = vpack.c.b16 %v441, %v440
    %458 = vmatpush.bf16.msra.mxu0 %v449
    %459 = vmatpush.bf16.msra.mxu0 %v448
    %460 = vmatpush.bf16.msra.mxu0 %v447
    %461 = vmatpush.bf16.msra.mxu0 %v446
    %462 = vmatpush.bf16.msra.mxu0 %v445
    %463 = vmatpush.bf16.msra.mxu0 %v444
    %464 = vmatpush.bf16.msra.mxu0 %v443
    %465 = vmatpush.bf16.msra.mxu0 %v442
    %466 = vmatmul.bf16.gmra.mxu0 %v393
    %v467 = vpop.f32.mrf.mxu0
    %v468 = vadd.f32 0.0, %v467
    %v469 = vpop.f32.mrf.mxu0
    %470 = vdwg.mxu0
    %v471 = vadd.f32 %v373, %v468
    %v472 = vperm.slane %v244, 3
    %v473 = vadd.f32 %v471, %v472
    %v474 = vmax.f32 %v473, 0.0
    %v475 = vpack.c.bf16 %v474, %v474
    %v476 = vld [vmem:[#allocation6] sm:$0xf]
    %v477 = vld [vmem:[#allocation6 + $0x4] sm:$0xf]
    %v478 = vld [vmem:[#allocation6 + $0x8] sm:$0xf]
    %v479 = vld [vmem:[#allocation6 + $0xc] sm:$0xf]
    %v480 = vld [vmem:[#allocation6 + $0x10] sm:$0xf]
    %v481 = vld [vmem:[#allocation6 + $0x14] sm:$0xf]
    %v482 = vld [vmem:[#allocation6 + $0x18] sm:$0xf]
    %v483 = vld [vmem:[#allocation6 + $0x1c] sm:$0xf]
    %v484 = vld [vmem:[#allocation6 + $0x20] sm:$0xf]
    %v485 = vld [vmem:[#allocation6 + $0x24] sm:$0xf]
    %v486 = vld [vmem:[#allocation6 + $0x28] sm:$0xf]
    %v487 = vld [vmem:[#allocation6 + $0x2c] sm:$0xf]
    %v488 = vld [vmem:[#allocation6 + $0x30] sm:$0xf]
    %v489 = vld [vmem:[#allocation6 + $0x34] sm:$0xf]
    %v490 = vld [vmem:[#allocation6 + $0x38] sm:$0xf]
    %v491 = vld [vmem:[#allocation6 + $0x3c] sm:$0xf]
    %v508 = vunpack.c.l.b16 %v476
    %v509 = vunpack.c.l.b16 %v477
    %v510 = vunpack.c.l.b16 %v478
    %v511 = vunpack.c.l.b16 %v479
    %v512 = vunpack.c.l.b16 %v480
    %v513 = vunpack.c.l.b16 %v481
    %v514 = vunpack.c.l.b16 %v482
    %v515 = vunpack.c.l.b16 %v483
    %v516 = vunpack.c.l.b16 %v484
    %v517 = vunpack.c.l.b16 %v485
    %v518 = vunpack.c.l.b16 %v486
    %v519 = vunpack.c.l.b16 %v487
    %v520 = vunpack.c.l.b16 %v488
    %v521 = vunpack.c.l.b16 %v489
    %v522 = vunpack.c.l.b16 %v490
    %v523 = vunpack.c.l.b16 %v491
    %v524 = vpack.c.b16 %v509, %v508
    %v525 = vpack.c.b16 %v511, %v510
    %v526 = vpack.c.b16 %v513, %v512
    %v527 = vpack.c.b16 %v515, %v514
    %v528 = vpack.c.b16 %v517, %v516
    %v529 = vpack.c.b16 %v519, %v518
    %v530 = vpack.c.b16 %v521, %v520
    %v531 = vpack.c.b16 %v523, %v522
    %540 = vmatpush.bf16.msra.mxu0 %v531
    %541 = vmatpush.bf16.msra.mxu0 %v530
    %542 = vmatpush.bf16.msra.mxu0 %v529
    %543 = vmatpush.bf16.msra.mxu0 %v528
    %544 = vmatpush.bf16.msra.mxu0 %v527
    %545 = vmatpush.bf16.msra.mxu0 %v526
    %546 = vmatpush.bf16.msra.mxu0 %v525
    %547 = vmatpush.bf16.msra.mxu0 %v524
    %548 = vmatmul.bf16.gmra.mxu0 %v475
    %v549 = vpop.f32.mrf.mxu0
    %v550 = vadd.f32 0.0, %v549
    %v551 = vpop.f32.mrf.mxu0
    %552 = vdwg.mxu0
    %v553 = vadd.f32 %v373, %v550
    %v554 = vperm.slane %v244, 4
    %v555 = vadd.f32 %v553, %v554
    %v556 = vmax.f32 %v555, 0.0
    %v557 = vpack.c.bf16 %v556, %v556
    %v558 = vld [vmem:[%s7] sm:$0xf]
    %v559 = vld [vmem:[%s7 + $0x4] sm:$0xf]
    %v560 = vld [vmem:[%s7 + $0x8] sm:$0xf]
    %v561 = vld [vmem:[%s7 + $0xc] sm:$0xf]
    %v562 = vld [vmem:[%s7 + $0x10] sm:$0xf]
    %v563 = vld [vmem:[%s7 + $0x14] sm:$0xf]
    %v564 = vld [vmem:[%s7 + $0x18] sm:$0xf]
    %v565 = vld [vmem:[%s7 + $0x1c] sm:$0xf]
    %v566 = vld [vmem:[%s7 + $0x20] sm:$0xf]
    %v567 = vld [vmem:[%s7 + $0x24] sm:$0xf]
    %v568 = vld [vmem:[%s7 + $0x28] sm:$0xf]
    %v569 = vld [vmem:[%s7 + $0x2c] sm:$0xf]
    %v570 = vld [vmem:[%s7 + $0x30] sm:$0xf]
    %v571 = vld [vmem:[%s7 + $0x34] sm:$0xf]
    %v572 = vld [vmem:[%s7 + $0x38] sm:$0xf]
    %v573 = vld [vmem:[%s7 + $0x3c] sm:$0xf]
    %v574 = vperm.slane %v244, 5
    %v591 = vunpack.c.l.b16 %v558
    %v592 = vunpack.c.l.b16 %v559
    %v593 = vunpack.c.l.b16 %v560
    %v594 = vunpack.c.l.b16 %v561
    %v595 = vunpack.c.l.b16 %v562
    %v596 = vunpack.c.l.b16 %v563
    %v597 = vunpack.c.l.b16 %v564
    %v598 = vunpack.c.l.b16 %v565
    %v599 = vunpack.c.l.b16 %v566
    %v600 = vunpack.c.l.b16 %v567
    %v601 = vunpack.c.l.b16 %v568
    %v602 = vunpack.c.l.b16 %v569
    %v603 = vunpack.c.l.b16 %v570
    %v604 = vunpack.c.l.b16 %v571
    %v605 = vunpack.c.l.b16 %v572
    %v606 = vunpack.c.l.b16 %v573
    %v607 = vpack.c.b16 %v592, %v591
    %v608 = vpack.c.b16 %v594, %v593
    %v609 = vpack.c.b16 %v596, %v595
    %v610 = vpack.c.b16 %v598, %v597
    %v611 = vpack.c.b16 %v600, %v599
    %v612 = vpack.c.b16 %v602, %v601
    %v613 = vpack.c.b16 %v604, %v603
    %v614 = vpack.c.b16 %v606, %v605
    %623 = vmatpush.bf16.msra.mxu0 %v614
    %624 = vmatpush.bf16.msra.mxu0 %v613
    %625 = vmatpush.bf16.msra.mxu0 %v612
    %626 = vmatpush.bf16.msra.mxu0 %v611
    %627 = vmatpush.bf16.msra.mxu0 %v610
    %628 = vmatpush.bf16.msra.mxu0 %v609
    %629 = vmatpush.bf16.msra.mxu0 %v608
    %630 = vmatpush.bf16.msra.mxu0 %v607
    %631 = vmatmul.bf16.gmra.mxu0 %v557
    %v632 = vpop.f32.mrf.mxu0
    %v633 = vadd.f32 %v574, %v632
    %v634 = vpop.f32.mrf.mxu0
    %635 = vdwg.mxu0
    %vm636 = vcmask 15360
    %637 = vst.msk [vmem:[%s8] sm:$0xff] %vm636, %v633
    // Predicated region
    $region46: #{tpu_custom_call.1} parent=1 // pred_check
      _
    $region47: #{tpu_custom_call.1} parent=1 // pred_check_branch
      %639 = sbr.rel (0) target = $region49
    $region48: #{tpu_custom_call.1} parent=1 // pred_region
      _
    $region49: #{tpu_custom_call.1} parent=1 // pred_fallthru
      _
    // Predicated region
    $region50: #{tpu_custom_call.1} parent=1 // pred_check
      _
    $region51: #{tpu_custom_call.1} parent=1 // pred_check_branch
      %641 = sbr.rel (0) target = $region53
    $region52: #{tpu_custom_call.1} parent=1 // pred_region
      _
    $region53: #{tpu_custom_call.1} parent=1 // pred_fallthru
      _
    %642 = vsyncpa [#allocation3], 1
    %643 = vsyncpa [#allocation5], 1

</llo_original>
